<compile_context>
chip_gen: v7x
topology: tpu7x:2x2x1
jax: 0.10.0
libtpu: 0.0.40
codegen_flags: <defaults>
</compile_context>

<pallas_src>
import functools

import jax
import jax.numpy as jnp
from jax.experimental import pallas as pl
from jax.experimental.pallas import tpu as pltpu


def _threshold_kernel(params_ref, x_ref, o_ref):
    """out = x, except |x| < threshold -> value.  DMA-bound; keep body simple."""
    x = x_ref[...]
    threshold = params_ref[0]                  # f32 scalar from SMEM
    value = params_ref[1].astype(x.dtype)      # f32 scalar from SMEM, cast to x dtype
    o_ref[...] = jnp.where(jnp.abs(x) < threshold, value, x)


def _round_up(x, m):
    return ((x + m - 1) // m) * m


def _sublane_min(dtype):
    # Minimum sublane tile per dtype width: 8 for 4-byte, 16 for 2-byte,
    # 32 for 1-byte (sub-32-bit dtypes pack along sublanes).
    itemsize = jnp.dtype(dtype).itemsize
    return {4: 8, 2: 16, 1: 32}.get(itemsize, 8)


def _tpu_vmem_capacity_bytes(default=64 * 1024 * 1024):
    # Generation-aware VMEM capacity; conservative 64 MiB (v7x per-TC) fallback.
    try:
        info = pltpu.get_tpu_info()
        cap = getattr(info, "vmem_capacity_bytes", None)
        if cap:
            return int(cap)
    except Exception:
        pass
    return default


def _tpu_num_tensorcores(default=2):
    # Best-effort TC count (megacore / v7x have 2).  Defaulting to 2 costs at
    # most one extra ~0.35 us grid step on single-TC parts.
    try:
        info = pltpu.get_tpu_info()
        for name in ("num_cores", "core_count", "num_tensorcores",
                     "tensorcores_per_chip", "cores_per_chip"):
            v = getattr(info, name, None)
            if v:
                return max(1, int(v))
    except Exception:
        pass
    return default


def threshold_activation(
    x,
    threshold=0.5,
    value=0.0,
    *,
    target_block_bytes=8 * 1024 * 1024,
    min_bytes_for_pallas=4 * 1024 * 1024,
):
    """Elementwise: out[i] = value if |x[i]| < threshold else x[i].

    Matches mThresholdActivation semantics: strict `<` on abs(x), original
    values kept elsewhere, NaNs preserved (abs(NaN) < t is False), same
    shape/dtype as input.  threshold/value may be Python floats or traced
    JAX scalars.
    """
    orig_shape = x.shape
    dtype = x.dtype
    n = x.size
    itemsize = jnp.dtype(dtype).itemsize
    lanes = 128

    if n == 0:
        return x

    # Fused XLA elementwise is already at the 2n-byte HBM roofline.  Use it for
    #   * small inputs (pallas_call boundary + grid stepping is pure overhead),
    #   * ragged sizes (n % 128 != 0): a lane-dense (rows, 128) slab would need
    #     a materialized jnp.pad on the input and a trailing slice on the
    #     output — each a full extra HBM pass (~3x traffic).  Skipping Pallas
    #     here keeps traffic at the minimum.
    if n * itemsize < min_bytes_for_pallas or n % lanes != 0:
        return jnp.where(jnp.abs(x) < threshold, jnp.asarray(value, dtype), x)

    slab = x.reshape(-1, lanes)            # free bitcast: n % 128 == 0
    rows = slab.shape[0]
    sub_min = _sublane_min(dtype)
    num_cores = _tpu_num_tensorcores()

    # VMEM budget: double-buffered input + output blocks (4 * block_bytes) plus
    # headroom must fit comfortably on every generation.
    vmem_cap = _tpu_vmem_capacity_bytes()
    vmem_budget = int(0.70 * vmem_cap)
    headroom = 8 * 1024 * 1024
    max_block_bytes = max(1 << 20, (vmem_budget - headroom) // 4)
    blk_bytes_target = min(int(target_block_bytes), max_block_bytes)
    ideal_rows = max(
        sub_min, (blk_bytes_target // (lanes * itemsize)) // sub_min * sub_min
    )

    if rows <= sub_min:
        # Block must equal the full (tiny) rows dim to satisfy tiling rules.
        row_tile = rows
    else:
        # Round the block count up to a multiple of the TC count so the
        # "parallel" grid axis splits evenly across cores (v7x / megacore).
        nblocks = pl.cdiv(rows, ideal_rows)
        nblocks = max(num_cores, _round_up(nblocks, num_cores))
        row_tile = _round_up(pl.cdiv(rows, nblocks), sub_min)

    grid = pl.cdiv(rows, row_tile)
    block_bytes = row_tile * lanes * itemsize
    vmem_limit = min(vmem_budget, max(32 * 1024 * 1024, 4 * block_bytes + headroom))

    # threshold/value via SMEM so traced scalars (e.g. learned threshold under
    # jit) are supported — no constants baked into the kernel.
    params = jnp.stack(
        [jnp.asarray(threshold, jnp.float32), jnp.asarray(value, jnp.float32)]
    )

    out_slab = pl.pallas_call(
        _threshold_kernel,
        out_shape=jax.ShapeDtypeStruct((rows, lanes), dtype),
        grid_spec=pltpu.PrefetchScalarGridSpec(
            num_scalar_prefetch=0,
            grid=(grid,),
            in_specs=[
                pl.BlockSpec(memory_space=pltpu.MemorySpace.SMEM),   # (2,) params
                pl.BlockSpec((row_tile, lanes), lambda i: (i, 0)),
            ],
            out_specs=pl.BlockSpec((row_tile, lanes), lambda i: (i, 0)),
        ),
        compiler_params=pltpu.CompilerParams(
            dimension_semantics=("parallel",),
            vmem_limit_bytes=int(vmem_limit),
        ),
        cost_estimate=pl.CostEstimate(
            flops=int(2 * n),
            transcendentals=0,
            bytes_accessed=int(2 * n * itemsize),
        ),
    )(params, slab)

    return out_slab.reshape(orig_shape)     # free bitcast back to original shape


def _reference(x, threshold=0.5, value=0.0):
    return jnp.where(jnp.abs(x) < threshold, jnp.asarray(value, x.dtype), x)


if __name__ == "__main__":
    key = jax.random.PRNGKey(0)
    k1, k2, k3 = jax.random.split(key, 3)

    # Small NCHW input consistent with a conv-style activation module.
    x_small = jax.random.normal(k1, (2, 4, 16, 16), dtype=jnp.float32)
    # Larger aligned input exercising the multi-block Pallas path.
    x_big = jax.random.normal(k2, (4, 16, 64, 64), dtype=jnp.float32)
    # Ragged flattened size (n % 128 != 0) — routed to the fused XLA path.
    x_ragged = jax.random.normal(k3, (2, 3, 7, 11), dtype=jnp.float32)

    for xi in (x_small, x_big, x_ragged):
        out = jax.block_until_ready(
            threshold_activation(xi, 0.5, 0.0, min_bytes_for_pallas=0)
        )
        ref = _reference(xi, 0.5, 0.0)
        assert out.shape == xi.shape and out.dtype == xi.dtype
        assert jnp.array_equal(out, ref), "mismatch vs reference"

    # Traced threshold/value under jit (SMEM scalar path) also matches.
    jit_fn = jax.jit(functools.partial(threshold_activation, min_bytes_for_pallas=0))
    out_jit = jax.block_until_ready(
        jit_fn(x_small, jnp.float32(0.25), jnp.float32(-1.0))
    )
    assert jnp.array_equal(out_jit, _reference(x_small, 0.25, -1.0)), (
        "jit/traced-scalar mismatch"
    )

    # Default config (small-input bypass) also matches.
    out_bypass = jax.block_until_ready(threshold_activation(x_small))
    assert jnp.array_equal(out_bypass, _reference(x_small)), "bypass mismatch"

    print("KERNEL_OK")
</pallas_src>

<mosaic_0001>
module attributes {stable_mosaic.version = 11 : i64} {
  func.func @_threshold_kernel(%arg0: i32, %arg1: memref<2xf32, #tpu.memory_space<smem>>, %arg2: memref<8x128xf32, #tpu.memory_space<vmem>>, %arg3: memref<8x128xf32, #tpu.memory_space<vmem>>) attributes {dimension_semantics = [#tpu.dimension_semantics<parallel>], iteration_bounds = array<i64: 2>, scalar_prefetch = 0 : i64, scratch_operands = 0 : i64, tpu.core_type = #tpu.core_type<tc>, window_params = [{transform_indices = @transform_0, window_bounds = array<i64: 2>}, {transform_indices = @transform_1, window_bounds = array<i64: 8, 128>}, {transform_indices = @transform_2, window_bounds = array<i64: 8, 128>}]} {
    %c0 = arith.constant 0 : index
    %c0_0 = arith.constant 0 : index
    %0 = vector.load %arg2[%c0, %c0_0] : memref<8x128xf32, #tpu.memory_space<vmem>>, vector<8x128xf32>
    %c0_1 = arith.constant 0 : index
    %1 = memref.load %arg1[%c0_1] : memref<2xf32, #tpu.memory_space<smem>>
    %c1 = arith.constant 1 : index
    %2 = memref.load %arg1[%c1] : memref<2xf32, #tpu.memory_space<smem>>
    %3 = math.absf %0 : vector<8x128xf32>
    %4 = vector.broadcast %1 : f32 to vector<8x128xf32>
    %5 = arith.cmpf olt, %3, %4 : vector<8x128xf32>
    %6 = vector.broadcast %2 : f32 to vector<8x128xf32>
    %7 = arith.select %5, %6, %0 : vector<8x128xi1>, vector<8x128xf32>
    %c0_2 = arith.constant 0 : index
    %c0_3 = arith.constant 0 : index
    %8 = vector.load %arg3[%c0_2, %c0_3] : memref<8x128xf32, #tpu.memory_space<vmem>>, vector<8x128xf32>
    tpu.vector_store %arg3[%c0_2, %c0_3], %7 {strides = array<i32>} : memref<8x128xf32, #tpu.memory_space<vmem>>, vector<8x128xf32>,
    return
  }
  func.func @transform_0(%arg0: i32) -> i32 {
    %c0_i32 = arith.constant 0 : i32
    %c0_i32_0 = arith.constant 0 : i32
    return %c0_i32 : i32
  }
  func.func @transform_1(%arg0: i32) -> (i32, i32) {
    %c0_i32 = arith.constant 0 : i32
    %c0_i32_0 = arith.constant 0 : i32
    return %arg0, %c0_i32 : i32, i32
  }
  func.func @transform_2(%arg0: i32) -> (i32, i32) {
    %c0_i32 = arith.constant 0 : i32
    %c0_i32_0 = arith.constant 0 : i32
    return %arg0, %c0_i32 : i32, i32
  }
}

</mosaic_0001>

<llo_original>
// kernel: tpu_custom_call.1
$region0: #{tpu_custom_call.1}
  #allocation0 [shape = 'u32[]', space=smem, size = 0x4, offset = 0x4, fixed_abs, tag = 'smem constant byte address 0x4 - core index']
  #allocation1 [shape = 'u32[144,128]{1,0:T(1,128)}', space=vmem, size = 0x12000, scoped, tag = 'internal scratch']
  %s0 = inlined_call_operand.hbm [shape: f32[2], index: 0, kind: input, shape index: {}]
  %s1 = inlined_call_operand.hbm [shape: f32[16,128], index: 1, kind: input, shape index: {}]
  %s2 = inlined_call_operand.hbm [shape: f32[16,128], index: 2, kind: output, shape index: {}]
  %s3 = sld [smem:[#allocation0]]
  $region49: #{tpu_custom_call.1} parent=0
    _
  %s5 = ssub.s32 1, %s3
  %s6 = scalar_select 0, %s5, %s3
  $region1: #{tpu_custom_call.1} parent=0
    #allocation2 [shape = 'u8[512]{0}', space=smem, size = 0x200, scoped, tag = 'input window, operand 0, single buffered']
    #allocation3 [shape = 's32[2]{0}', space=sflag, size = 0x8, scoped, tag = 'scoped memory for tpu_custom_call.1']
    #allocation4 [shape = 's32[2]{0}', space=sflag, size = 0x8, scoped, tag = 'scoped memory for tpu_custom_call.1']
    #allocation5 [shape = 's32[2]{0}', space=sflag, size = 0x8, scoped, tag = 'scoped memory for tpu_custom_call.1']
    #allocation6 [shape = 'u8[8192]{0}', space=vmem, size = 0x2000, scoped, tag = 'input window, operand 1']
    #allocation7 [shape = 'u8[8192]{0}', space=vmem, size = 0x2000, scoped, tag = 'output window, operand 0']
    %7 = vsyncpa [#allocation5], 0
    %8 = vsyncpa [#allocation3], 0
    %s9 = scalar_lea.sflag [#allocation3], 1
    %10 = vsyncpa %s9, 0
    %11 = vsyncpa [#allocation4], 0
    %s12 = scalar_lea.sflag [#allocation4], 1
    %13 = vsyncpa %s12, 0
    loop: start=0, step=1, limit=4
    $region2: #{tpu_custom_call.1} parent=1 // loop_pre_header
      _
    $region3: #{tpu_custom_call.1} parent=1 // loop_header
      %s15 = sphi 0, %s19
      %p16 = scmp.ge.s32.totalorder %s15, 4
      %s23 = sphi 0, %s23
      %s25 = sphi 0, %s23
      %s26 = sphi 0, %s25
      %s40 = sphi 0, %s26
      %s46 = sphi 0, %s48
      %s49 = sphi 0, %s46
      %s50 = sphi 0, %s49
      %s66 = sphi 0, %s50
      %s72 = sphi 0, %s74
      %s75 = sphi 0, %s72
      %s76 = sphi 0, %s75
      %s92 = sphi 0, %s76
    $region4: #{tpu_custom_call.1} parent=1 // loop_header_branch
      %18 = sbr.rel (%p16) target = $region8
    $region5: #{tpu_custom_call.1} parent=1 // loop_body
      %s20 = ssub.s32 %s15, 1
      %s21 = ssub.s32 %s15, 2
      %s22 = sadd.s32 %s15, 1
      %s24 = sadd.s32 %s23, 1
      %p27 = scmp.eq.s32.totalorder %s15, 1
      %p28 = scmp.ne.s32.totalorder %s23, %s25
      %p29 = scmp.eq.s32.totalorder %s15, 0
      %p30 = por %p28, %p29
      %p31 = scmp.ne.s32.totalorder %s23, %s25
      %p32 = scmp.eq.s32.totalorder %s20, 1
      %p33 = por %p31, %p32
      %p34 = scmp.ne.s32.totalorder %s25, %s26
      %p35 = scmp.eq.s32.totalorder %s20, 0
      %p36 = por %p34, %p35
      %p37 = scmp.ne.s32.totalorder %s25, %s26
      %p38 = scmp.eq.s32.totalorder %s21, 1
      %p39 = por %p37, %p38
      %p41 = scmp.ne.s32.totalorder %s26, %s40
      %p42 = scmp.eq.s32.totalorder %s21, 0
      %p43 = por %p41, %p42
      %s44 = ssub.s32 %s15, %s22
      %p45 = scmp.eq.s32.totalorder %s44, 0
      %s47 = sadd.s32 %s46, 1
      %s48 = scalar_select %p45, %s46, %s47
      %p51 = pneg %p45
      %p52 = scmp.eq.s32.totalorder %s15, 1
      %p53 = por %p51, %p52
      %p54 = scmp.ne.s32.totalorder %s46, %s49
      %p55 = scmp.eq.s32.totalorder %s15, 0
      %p56 = por %p54, %p55
      %p57 = scmp.ne.s32.totalorder %s46, %s49
      %p58 = scmp.eq.s32.totalorder %s20, 1
      %p59 = por %p57, %p58
      %p60 = scmp.ne.s32.totalorder %s49, %s50
      %p61 = scmp.eq.s32.totalorder %s20, 0
      %p62 = por %p60, %p61
      %p63 = scmp.ne.s32.totalorder %s49, %s50
      %p64 = scmp.eq.s32.totalorder %s21, 1
      %p65 = por %p63, %p64
      %p67 = scmp.ne.s32.totalorder %s50, %s66
      %p68 = scmp.eq.s32.totalorder %s21, 0
      %p69 = por %p67, %p68
      %s70 = ssub.s32 %s15, %s22
      %p71 = scmp.eq.s32.totalorder %s70, 0
      %s73 = sadd.s32 %s72, 1
      %s74 = scalar_select %p71, %s72, %s73
      %p77 = pneg %p71
      %p78 = scmp.eq.s32.totalorder %s15, 1
      %p79 = por %p77, %p78
      %p80 = scmp.ne.s32.totalorder %s72, %s75
      %p81 = scmp.eq.s32.totalorder %s15, 0
      %p82 = por %p80, %p81
      %p83 = scmp.ne.s32.totalorder %s72, %s75
      %p84 = scmp.eq.s32.totalorder %s20, 1
      %p85 = por %p83, %p84
      %p86 = scmp.ne.s32.totalorder %s75, %s76
      %p87 = scmp.eq.s32.totalorder %s20, 0
      %p88 = por %p86, %p87
      %p89 = scmp.ne.s32.totalorder %s75, %s76
      %p90 = scmp.eq.s32.totalorder %s21, 1
      %p91 = por %p89, %p90
      %p93 = scmp.ne.s32.totalorder %s76, %s92
      %p94 = scmp.eq.s32.totalorder %s21, 0
      %p95 = por %p93, %p94
      %p96 = scmp.le.s32.totalorder 1, %s15
      %p97 = scmp.lt.s32.totalorder %s15, 3
      %p98 = pnand %p96, %p97
      %p99 = pneg %p98
      // Predicated region
      $region9: #{tpu_custom_call.1} parent=5 // pred_check
        _
      $region10: #{tpu_custom_call.1} parent=5 // pred_check_branch
        %101 = sbr.rel (%p98) target = $region12
      $region11: #{tpu_custom_call.1} parent=5 // pred_region
        %s102 = ssub.s32 %s15, 1
        // Predicated region
        $region13: #{tpu_custom_call.1} parent=11 // pred_check
          %p103 = pneg %p36
        $region14: #{tpu_custom_call.1} parent=11 // pred_check_branch
          %105 = sbr.rel (%p103) target = $region16
        $region15: #{tpu_custom_call.1} parent=11 // pred_region
          %s107 = ssub.s32 16, 16
          %108 = vsyncadd [#allocation5], %s107
          %111 = dma.hbm_to_smem %s0, 16, [#allocation2], [#allocation5]
        $region16: #{tpu_custom_call.1} parent=11 // pred_fallthru
          _
      $region12: #{tpu_custom_call.1} parent=5 // pred_fallthru
        _
      %p112 = scmp.lt.s32.totalorder %s15, 2
      // Predicated region
      $region17: #{tpu_custom_call.1} parent=5 // pred_check
        %p113 = pneg %p112
      $region18: #{tpu_custom_call.1} parent=5 // pred_check_branch
        %115 = sbr.rel (%p113) target = $region20
      $region19: #{tpu_custom_call.1} parent=5 // pred_region
        // Predicated region
        $region21: #{tpu_custom_call.1} parent=19 // pred_check
          %p116 = pneg %p56
        $region22: #{tpu_custom_call.1} parent=19 // pred_check_branch
          %118 = sbr.rel (%p116) target = $region24
        $region23: #{tpu_custom_call.1} parent=19 // pred_region
          %s119 = sand.u32 %s46, 1
          %s120 = scalar_lea.sflag [#allocation3], %s119
          %s121 = sand.u32 %s46, 1
          %s122 = smul.addr %s121, 8
          %s123 = scalar_lea.vmem [#allocation6], %s122
          %s125 = ssub.s32 128, 128
          %126 = vsyncadd %s120, %s125
          %s127 = smul.addr %s15, 128
          %s128 = scalar_lea.hbm %s1, %s127
          %s130 = sshll.u32 %s123, 4
          %s131 = int_to_ptr.vmem [resolvable:$true] %s130
          %133 = dma.hbm_to_vmem [thread:$0]  %s128, 128, %s131, %s120
        $region24: #{tpu_custom_call.1} parent=19 // pred_fallthru
          _
      $region20: #{tpu_custom_call.1} parent=5 // pred_fallthru
        _
      %p134 = scmp.le.s32.totalorder 1, %s15
      %p135 = scmp.lt.s32.totalorder %s15, 3
      %p136 = pnand %p134, %p135
      %p137 = pneg %p136
      // Predicated region
      $region25: #{tpu_custom_call.1} parent=5 // pred_check
        _
      $region26: #{tpu_custom_call.1} parent=5 // pred_check_branch
        %139 = sbr.rel (%p136) target = $region28
      $region27: #{tpu_custom_call.1} parent=5 // pred_region
        %s140 = ssub.s32 %s15, 1
        // Predicated region
        $region29: #{tpu_custom_call.1} parent=27 // pred_check
          %p141 = pneg %p36
        $region30: #{tpu_custom_call.1} parent=27 // pred_check_branch
          %143 = sbr.rel (%p141) target = $region32
        $region31: #{tpu_custom_call.1} parent=27 // pred_region
          %144 = dma.done [#allocation5], 16
        $region32: #{tpu_custom_call.1} parent=27 // pred_fallthru
          _
        %s145 = sand.u32 %s49, 1
        %s146 = scalar_lea.sflag [#allocation3], %s145
        %s147 = sand.u32 %s49, 1
        %s148 = smul.addr %s147, 8
        %s149 = scalar_lea.vmem [#allocation6], %s148
        // Predicated region
        $region33: #{tpu_custom_call.1} parent=27 // pred_check
          %p150 = pneg %p62
        $region34: #{tpu_custom_call.1} parent=27 // pred_check_branch
          %152 = sbr.rel (%p150) target = $region36
        $region35: #{tpu_custom_call.1} parent=27 // pred_region
          %153 = dma.done %s146, 128
        $region36: #{tpu_custom_call.1} parent=27 // pred_fallthru
          _
        %154 = sfence
        %p155 = pneg %p36
        %p156 = pneg %p33
        %s157 = sand.u32 %s49, 1
        %s158 = scalar_lea.sflag [#allocation3], %s157
        %s159 = sand.u32 %s49, 1
        %s160 = smul.addr %s159, 8
        %s161 = scalar_lea.vmem [#allocation6], %s160
        %p162 = pneg %p62
        %p163 = pneg %p59
        %p164 = pneg %p88
        %p165 = pneg %p85
        %s166 = sand.u32 %s75, 1
        %s167 = scalar_lea.sflag [#allocation4], %s166
        %s168 = sand.u32 %s75, 1
        %s169 = smul.addr %s168, 8
        %s170 = scalar_lea.vmem [#allocation7], %s169
        %v171 = vld [vmem:[%s149] sm:$0xff]
        %s172 = sld [smem:[#allocation2]]
        %s173 = sld [smem:[#allocation2 + $0x1]]
        %v174 = vand.u32 2147483647, %v171
        %v175 = vstv %s172
        %vm176 = vcmp.lt.f32.partialorder %v174, %v175
        %v177 = vstv %s173
        %v178 = vsel %vm176, %v177, %v171
        %179 = vst [vmem:[%s170] sm:$0xff] %v178
        %s180 = sand.u32 %s75, 1
        %s181 = scalar_lea.sflag [#allocation4], %s180
        %s182 = sand.u32 %s75, 1
        %s183 = smul.addr %s182, 8
        %s184 = scalar_lea.vmem [#allocation7], %s183
        // Predicated region
        $region37: #{tpu_custom_call.1} parent=27 // pred_check
          %p185 = pneg %p85
        $region38: #{tpu_custom_call.1} parent=27 // pred_check_branch
          %187 = sbr.rel (%p185) target = $region40
        $region39: #{tpu_custom_call.1} parent=27 // pred_region
          %s189 = ssub.s32 128, 128
          %190 = vsyncadd %s181, %s189
          %s191 = smul.addr %s20, 128
          %s192 = scalar_lea.hbm %s2, %s191
          %s194 = sshll.u32 %s184, 4
          %s195 = int_to_ptr.vmem [resolvable:$true] %s194
          %197 = dma.vmem_to_hbm [thread:$0]  %s195, 128, %s192, %s181
        $region40: #{tpu_custom_call.1} parent=27 // pred_fallthru
          _
      $region28: #{tpu_custom_call.1} parent=5 // pred_fallthru
        _
      %p198 = scmp.le.s32.totalorder 2, %s15
      // Predicated region
      $region41: #{tpu_custom_call.1} parent=5 // pred_check
        %p199 = pneg %p198
      $region42: #{tpu_custom_call.1} parent=5 // pred_check_branch
        %201 = sbr.rel (%p199) target = $region44
      $region43: #{tpu_custom_call.1} parent=5 // pred_region
        %s202 = ssub.s32 %s15, 2
        // Predicated region
        $region45: #{tpu_custom_call.1} parent=43 // pred_check
          %p203 = pneg %p91
        $region46: #{tpu_custom_call.1} parent=43 // pred_check_branch
          %205 = sbr.rel (%p203) target = $region48
        $region47: #{tpu_custom_call.1} parent=43 // pred_region
          %s206 = sand.u32 %s76, 1
          %s207 = scalar_lea.sflag [#allocation4], %s206
          %s208 = sand.u32 %s76, 1
          %s209 = smul.addr %s208, 8
          %s210 = scalar_lea.vmem [#allocation7], %s209
          %211 = dma.done %s207, 128
        $region48: #{tpu_custom_call.1} parent=43 // pred_fallthru
          _
      $region44: #{tpu_custom_call.1} parent=5 // pred_fallthru
        _
    $region6: #{tpu_custom_call.1} parent=1 // loop_footer
      %s19 = sadd.s32 1, %s15
    $region7: #{tpu_custom_call.1} parent=1 // loop_footer_branch
      %14 = sbr.rel target = $region3
    $region8: #{tpu_custom_call.1} parent=1 // loop_exit
      _
    %212 = vsyncpa [#allocation3], 1
    %s213 = scalar_lea.sflag [#allocation3], 1
    %214 = vsyncpa %s213, 1
    %215 = vsyncpa [#allocation4], 1
    %s216 = scalar_lea.sflag [#allocation4], 1
    %217 = vsyncpa %s216, 1
    %218 = vsyncpa [#allocation5], 1
    %s219 = scalar_lea.sflag [#allocation5], 1
    %220 = vsyncpa %s219, 1

</llo_original>
